<compile_context>
chip_gen: v7x
topology: tpu7x:2x2x1
jax: 0.10.0
libtpu: 0.0.40
codegen_flags: <defaults>
</compile_context>

<pallas_src>
import jax
import jax.numpy as jnp
from jax.experimental import pallas as pl
from jax.experimental.pallas import tpu as pltpu

LANE = 128


# ---------------------------------------------------------------------------
# Generation-aware compiler parameters (v5e/v6e: 128 MiB VMEM, v7x: 64 MiB)
# ---------------------------------------------------------------------------
def _vmem_capacity_bytes():
    try:
        info = pltpu.get_tpu_info()
        return int(getattr(info, "vmem_capacity_bytes", 64 * 1024 * 1024))
    except Exception:
        return 64 * 1024 * 1024


_VMEM_CAP = _vmem_capacity_bytes()
_VMEM_LIMIT = max(32 * 1024 * 1024,
                  min(int(_VMEM_CAP * 3 // 4), 100 * 1024 * 1024))
_PROJ_TILE_CAP = 512                                   # mem-bound projection stage
_ATTN_TILE_CAP = 256 if _VMEM_CAP >= 100 * 1024 * 1024 else 128


def _compiler_params(n_grid_axes):
    return pltpu.CompilerParams(
        dimension_semantics=("parallel",) * n_grid_axes,
        vmem_limit_bytes=_VMEM_LIMIT,
    )


def _round_up(n, m):
    return ((n + m - 1) // m) * m


def _pick_tile(n, cap):
    """Largest divisor of n that is <= cap and (8-multiple or == n)."""
    cap = max(1, min(cap, n))
    for t in range(cap, 0, -1):
        if n % t == 0 and (t % 8 == 0 or t == n):
            return t
    return n


# ---------------------------------------------------------------------------
# Kernel 1: NonTransition conv+ReLU on gathered raw rows, kNN max-pool, and all
# per-point PT projections (folded linear1 / q / k / v / pos-MLP first linear).
# Outputs are wide lane-dense slabs:  x2 (Cp), qu = [qa|u] (2*Mp),
# kvu = [ka|val|u] (3*Mp, kept in HBM for the attention kernel's row gather).
# ---------------------------------------------------------------------------
def _nt_project_kernel(xn_ref, p_ref, ntw_ref, ntb_ref, wqkv_ref, bqkv_ref,
                       wp1_ref, x2_ref, qu_ref, kvu_ref):
    tq, knt, cin = xn_ref.shape
    cp = ntw_ref.shape[1]
    mp = wp1_ref.shape[1]

    # NonTransition pointwise conv + ReLU applied to the gathered raw neighbor
    # rows (commutes with the gather), then the kNN local max-pool.
    xn = xn_ref[...].reshape(tq * knt, cin)
    h = jnp.maximum(
        jnp.dot(xn.astype(jnp.bfloat16), ntw_ref[...],
                preferred_element_type=jnp.float32) + ntb_ref[...], 0.0)
    x2 = jnp.max(h.reshape(tq, knt, cp), axis=1)                  # (tq, Cp)

    # Folded projections: one wide (Cp, 3*Mp) bf16 matmul for qa|ka|val.
    proj = jnp.dot(x2.astype(jnp.bfloat16), wqkv_ref[...],
                   preferred_element_type=jnp.float32) + bqkv_ref[...]
    # Position-MLP first linear, distributed across the (p_i - p_j) subtraction.
    u = jnp.dot(p_ref[...], wp1_ref[...], preferred_element_type=jnp.float32)

    x2_ref[...] = x2
    qu_ref[:, :mp] = proj[:, :mp]            # qa (ba1 folded in)
    qu_ref[:, mp:] = u
    kvu_ref[:, :2 * mp] = proj[:, mp:]       # ka | val
    kvu_ref[:, 2 * mp:] = u


def nt_project(x_nbr, p, fp, *, tq):
    R, knt, cin = x_nbr.shape
    d = p.shape[1]
    cp = fp["nt_w"].shape[1]
    mp = fp["wp1"].shape[1]

    weights = [fp["nt_w"], fp["nt_b"], fp["w_qkv"], fp["b_qkv"], fp["wp1"]]
    rep = lambda a: pl.BlockSpec(a.shape, lambda i: (0, 0))

    return pl.pallas_call(
        _nt_project_kernel,
        out_shape=(
            jax.ShapeDtypeStruct((R, cp), jnp.float32),
            jax.ShapeDtypeStruct((R, 2 * mp), jnp.float32),
            jax.ShapeDtypeStruct((R, 3 * mp), jnp.float32),
        ),
        grid_spec=pltpu.PrefetchScalarGridSpec(
            num_scalar_prefetch=0,
            grid=(R // tq,),
            in_specs=[
                pl.BlockSpec((tq, knt, cin), lambda i: (i, 0, 0)),
                pl.BlockSpec((tq, d), lambda i: (i, 0)),
            ] + [rep(a) for a in weights],
            out_specs=(
                pl.BlockSpec((tq, cp), lambda i: (i, 0)),
                pl.BlockSpec((tq, 2 * mp), lambda i: (i, 0)),
                pl.BlockSpec((tq, 3 * mp), lambda i: (i, 0)),
            ),
        ),
        compiler_params=_compiler_params(1),
    )(x_nbr, p, *weights)


# ---------------------------------------------------------------------------
# Kernel 2: vector attention.  The pt_k neighbor rows of the (ka|val|u) slab are
# DMA-gathered in-kernel from HBM using the prefetched index table, then the
# pairwise position/attention MLPs, per-channel softmax, aggregation, linear2,
# residual and ReLU run on the tile.
# ---------------------------------------------------------------------------
def _pt_attention_kernel(idx_ref, x2_ref, qu_ref, kvu_hbm,
                         bp1_ref, wp2_ref, bp2_ref, wa1_ref, wa2_ref, ba2_ref,
                         w2_ref, b2_ref, o_ref, nbr_ref, sem):
    tq, K, three_m = nbr_ref.shape
    mp = three_m // 3
    row0 = pl.program_id(0) * tq

    # ---- in-kernel DMA gather of the K neighbor rows for each query row -----
    def _start_q(q, carry):
        def _start_k(kk, c):
            j = idx_ref[(row0 + q) * K + kk]                 # global row index
            pltpu.make_async_copy(kvu_hbm.at[pl.ds(j, 1), :],
                                  nbr_ref.at[q, pl.ds(kk, 1), :],
                                  sem.at[0]).start()
            return c
        return jax.lax.fori_loop(0, K, _start_k, carry)

    jax.lax.fori_loop(0, tq, _start_q, 0)

    def _wait(_, carry):
        pltpu.make_async_copy(kvu_hbm.at[pl.ds(0, 1), :],
                              nbr_ref.at[0, pl.ds(0, 1), :],
                              sem.at[0]).wait()
        return carry

    jax.lax.fori_loop(0, tq * K, _wait, 0)

    nbr = nbr_ref[...]                                       # (tq, K, 3*Mp)
    ka_n = nbr[:, :, :mp]
    val_n = nbr[:, :, mp:2 * mp]
    u_n = nbr[:, :, 2 * mp:]
    qu = qu_ref[...]
    qa = qu[:, :mp]
    u = qu[:, mp:]

    # position encoding delta_ij = relu((u_i - u_j) + bp1) @ wp2 + bp2
    d_h = jnp.maximum((u[:, None, :] - u_n) + bp1_ref[...], 0.0)
    delta = (jnp.dot(d_h.reshape(tq * K, mp).astype(jnp.bfloat16), wp2_ref[...],
                     preferred_element_type=jnp.float32) + bp2_ref[...])

    # attention-MLP first linear distributed:  qa_i - ka_j + delta @ wa1
    da = jnp.dot(delta.astype(jnp.bfloat16), wa1_ref[...],
                 preferred_element_type=jnp.float32)
    vplus = val_n + delta.reshape(tq, K, mp)     # delta consumed early (live range)
    hid = jnp.maximum((qa[:, None, :] - ka_n).reshape(tq * K, mp) + da, 0.0)
    logits = (jnp.dot(hid.astype(jnp.bfloat16), wa2_ref[...],
                      preferred_element_type=jnp.float32)
              + ba2_ref[...]).reshape(tq, K, mp)

    # per-channel softmax over the K valid neighbors (no mask; denom >= 1 after
    # max subtraction); reciprocal goes to the EUP slot.
    e = jnp.exp(logits - jnp.max(logits, axis=1, keepdims=True))
    inv = pl.reciprocal(jnp.sum(e, axis=1), approx=True)           # (tq, Mp)
    agg = jnp.sum(e * vplus, axis=1) * inv                          # (tq, Mp)

    # linear2 (Mp -> Cp), residual with the pooled features, ReLU.
    y = jnp.dot(agg.astype(jnp.bfloat16), w2_ref[...],
                preferred_element_type=jnp.float32) + b2_ref[...]
    o_ref[...] = jnp.maximum(x2_ref[...] + y, 0.0)


def pt_attention(pt_idx_flat, x2, qu, kvu, fp, pt_k, *, tq):
    R, cp = x2.shape
    mp = fp["bp1"].shape[1]

    weights = [fp["bp1"], fp["wp2"], fp["bp2"], fp["wa1"], fp["wa2"], fp["ba2"],
               fp["w2"], fp["b2"]]
    rep = lambda a: pl.BlockSpec(a.shape, lambda i, idx: (0, 0))

    return pl.pallas_call(
        _pt_attention_kernel,
        out_shape=jax.ShapeDtypeStruct((R, cp), jnp.float32),
        grid_spec=pltpu.PrefetchScalarGridSpec(
            num_scalar_prefetch=1,                     # flat (R*pt_k,) int32 table
            grid=(R // tq,),
            in_specs=[
                pl.BlockSpec((tq, cp), lambda i, idx: (i, 0)),
                pl.BlockSpec((tq, 2 * mp), lambda i, idx: (i, 0)),
                pl.BlockSpec(memory_space=pl.ANY),     # kvu stays in HBM, gathered
            ] + [rep(a) for a in weights],
            out_specs=pl.BlockSpec((tq, cp), lambda i, idx: (i, 0)),
            scratch_shapes=[
                pltpu.VMEM((tq, pt_k, 3 * mp), jnp.float32),
                pltpu.SemaphoreType.DMA((1,)),
            ],
        ),
        compiler_params=_compiler_params(1),
    )(pt_idx_flat, x2, qu, kvu, *weights)


# ---------------------------------------------------------------------------
# JAX glue: kNN indices, parameter folding + lane padding, forward pass
# ---------------------------------------------------------------------------
def knn_indices(p, k):
    """p: (B, N, D) -> int32 (B, N, k), matmul-form d2 (no (B,N,N,D) temp)."""
    sq = jnp.sum(p * p, axis=-1)                                   # (B, N)
    d2 = sq[:, :, None] + sq[:, None, :] - 2.0 * jnp.einsum("bnd,bmd->bnm", p, p)
    _, idx = jax.lax.top_k(-d2, k)
    return idx.astype(jnp.int32)


def prepare_params(params, *, lane=LANE):
    """Exact algebraic folds + zero-padding of channel dims to 128 lanes + bf16
    weights for the MXU (biases stay f32)."""
    w1, b1 = params["w1"], params["b1"]
    wq_f = w1 @ params["wq"]
    bq_f = b1 @ params["wq"] + params["bq"]
    wk_f = w1 @ params["wk"]
    bk_f = b1 @ params["wk"] + params["bk"]
    wv_f = w1 @ params["wv"]
    bv_f = b1 @ params["wv"] + params["bv"]
    wa1, ba1 = params["wa1"], params["ba1"]
    wqa, bqa = wq_f @ wa1, bq_f @ wa1 + ba1          # query side incl. ba1
    wka, bka = wk_f @ wa1, bk_f @ wa1                # key side

    mid = wa1.shape[0]
    out_c = params["nt_w"].shape[1]
    mp = _round_up(mid, lane)
    cp = _round_up(out_c, lane)

    def pad2(w, r, c):
        return jnp.pad(w, ((0, r - w.shape[0]), (0, c - w.shape[1])))

    return {
        "nt_w": pad2(params["nt_w"], params["nt_w"].shape[0], cp).astype(jnp.bfloat16),
        "nt_b": pad2(params["nt_b"], 1, cp),
        "w_qkv": jnp.concatenate(
            [pad2(wqa, cp, mp), pad2(wka, cp, mp), pad2(wv_f, cp, mp)],
            axis=1).astype(jnp.bfloat16),
        "b_qkv": jnp.concatenate(
            [pad2(bqa, 1, mp), pad2(bka, 1, mp), pad2(bv_f, 1, mp)], axis=1),
        "wp1": pad2(params["wp1"], params["wp1"].shape[0], mp),     # f32 (coords)
        "bp1": pad2(params["bp1"], 1, mp),
        "wp2": pad2(params["wp2"], mp, mp).astype(jnp.bfloat16),
        "bp2": pad2(params["bp2"], 1, mp),
        "wa1": pad2(wa1, mp, mp).astype(jnp.bfloat16),
        "wa2": pad2(params["wa2"], mp, mp).astype(jnp.bfloat16),
        "ba2": pad2(params["ba2"], 1, mp),
        "w2": pad2(params["w2"], mp, cp).astype(jnp.bfloat16),
        "b2": pad2(params["b2"], 1, cp),
    }


def init_ntpt_params(key, in_c, out_c, mid_c, coord_c):
    shapes = {
        "nt_w": (in_c, out_c),   "nt_b": (1, out_c),
        "w1":  (out_c, mid_c),   "b1":  (1, mid_c),
        "wq":  (mid_c, mid_c),   "bq":  (1, mid_c),
        "wk":  (mid_c, mid_c),   "bk":  (1, mid_c),
        "wv":  (mid_c, mid_c),   "bv":  (1, mid_c),
        "wp1": (coord_c, mid_c), "bp1": (1, mid_c),
        "wp2": (mid_c, mid_c),   "bp2": (1, mid_c),
        "wa1": (mid_c, mid_c),   "ba1": (1, mid_c),
        "wa2": (mid_c, mid_c),   "ba2": (1, mid_c),
        "w2":  (mid_c, out_c),   "b2":  (1, out_c),
    }
    params = {}
    keys = jax.random.split(key, len(shapes))
    for (name, shape), sub in zip(sorted(shapes.items()), keys):
        if name.startswith("b") or name == "nt_b":
            params[name] = jnp.zeros(shape, jnp.float32)
        else:
            fan_in = shape[0]
            params[name] = (jax.random.normal(sub, shape, jnp.float32)
                            * (1.0 / jnp.sqrt(jnp.float32(fan_in))))
    return params


def ntpt_forward(params, x, p1, nt_k, pt_k):
    """x: (B, N, Cin) channel-last features; p1: (B, N, coord).  -> (y, p2)."""
    B, N, cin = x.shape
    out_c = params["nt_w"].shape[1]
    R = B * N

    fp = prepare_params(params)

    # kNN once with the larger k; slice for the two stages.  Indices are made
    # global so the (B, N) axes can be flattened into one long row axis.
    kmax = max(nt_k, pt_k)
    idx = knn_indices(p1, kmax) + (jnp.arange(B, dtype=jnp.int32) * N)[:, None, None]
    nt_idx = idx[:, :, :nt_k].reshape(R, nt_k)
    pt_idx = idx[:, :, :pt_k].reshape(R * pt_k)       # flat 1-D -> cheap SMEM pad

    x_flat = x.reshape(R, cin)
    p_flat = p1.reshape(R, -1)
    x_nbr = jnp.take(x_flat, nt_idx, axis=0)          # (R, nt_k, Cin) raw rows

    tq1 = _pick_tile(R, _PROJ_TILE_CAP)
    x2, qu, kvu = nt_project(x_nbr, p_flat, fp, tq=tq1)

    tq2 = _pick_tile(R, _ATTN_TILE_CAP)
    y = pt_attention(pt_idx, x2, qu, kvu, fp, pt_k, tq=tq2)

    y = y[:, :out_c].reshape(B, N, out_c)
    return y, p1                                       # NonTransition keeps points


if __name__ == "__main__":
    B, N = 2, 16
    IN_C, OUT_C, MID_C, COORD_C = 8, 32, 16, 3
    NT_K, PT_K = 4, 4

    key = jax.random.PRNGKey(0)
    kx, kp, kw = jax.random.split(key, 3)
    x = jax.random.normal(kx, (B, N, IN_C), jnp.float32)
    p1 = jax.random.normal(kp, (B, N, COORD_C), jnp.float32)
    params = init_ntpt_params(kw, IN_C, OUT_C, MID_C, COORD_C)

    y, p2 = ntpt_forward(params, x, p1, NT_K, PT_K)
    y, p2 = jax.block_until_ready((y, p2))

    assert y.shape == (B, N, OUT_C) and p2.shape == (B, N, COORD_C)
    assert bool(jnp.all(jnp.isfinite(y)))
    print("KERNEL_OK")
</pallas_src>

<mosaic_0001>
module attributes {stable_mosaic.version = 11 : i64} {
  func.func @_nt_project_kernel(%arg0: i32, %arg1: memref<32x4x8xf32, #tpu.memory_space<vmem>>, %arg2: memref<32x3xf32, #tpu.memory_space<vmem>>, %arg3: memref<8x128xbf16, #tpu.memory_space<vmem>>, %arg4: memref<1x128xf32, #tpu.memory_space<vmem>>, %arg5: memref<128x384xbf16, #tpu.memory_space<vmem>>, %arg6: memref<1x384xf32, #tpu.memory_space<vmem>>, %arg7: memref<3x128xf32, #tpu.memory_space<vmem>>, %arg8: memref<32x128xf32, #tpu.memory_space<vmem>>, %arg9: memref<32x256xf32, #tpu.memory_space<vmem>>, %arg10: memref<32x384xf32, #tpu.memory_space<vmem>>) attributes {dimension_semantics = [#tpu.dimension_semantics<parallel>], iteration_bounds = array<i64: 1>, scalar_prefetch = 0 : i64, scratch_operands = 0 : i64, tpu.core_type = #tpu.core_type<tc>, window_params = [{transform_indices = @transform_0, window_bounds = array<i64: 32, 4, 8>}, {transform_indices = @transform_1, window_bounds = array<i64: 32, 3>}, {pipeline_mode = #tpu.pipeline_mode<synchronous>, transform_indices = @transform_2, window_bounds = array<i64: 8, 128>}, {pipeline_mode = #tpu.pipeline_mode<synchronous>, transform_indices = @transform_3, window_bounds = array<i64: 1, 128>}, {pipeline_mode = #tpu.pipeline_mode<synchronous>, transform_indices = @transform_4, window_bounds = array<i64: 128, 384>}, {pipeline_mode = #tpu.pipeline_mode<synchronous>, transform_indices = @transform_5, window_bounds = array<i64: 1, 384>}, {pipeline_mode = #tpu.pipeline_mode<synchronous>, transform_indices = @transform_6, window_bounds = array<i64: 3, 128>}, {transform_indices = @transform_7, window_bounds = array<i64: 32, 128>}, {transform_indices = @transform_8, window_bounds = array<i64: 32, 256>}, {transform_indices = @transform_9, window_bounds = array<i64: 32, 384>}]} {
    %c0 = arith.constant 0 : index
    %c0_0 = arith.constant 0 : index
    %c0_1 = arith.constant 0 : index
    %0 = vector.load %arg1[%c0, %c0_0, %c0_1] : memref<32x4x8xf32, #tpu.memory_space<vmem>>, vector<32x4x8xf32>
    %1 = vector.shape_cast %0 : vector<32x4x8xf32> to vector<128x8xf32>
    %2 = arith.truncf %1 : vector<128x8xf32> to vector<128x8xbf16>
    %c0_2 = arith.constant 0 : index
    %c0_3 = arith.constant 0 : index
    %3 = vector.load %arg3[%c0_2, %c0_3] : memref<8x128xbf16, #tpu.memory_space<vmem>>, vector<8x128xbf16>
    %cst = arith.constant dense<0.000000e+00> : vector<128x128xf32>
    %4 = tpu.matmul %2, %3, %cst {dimension_numbers = #tpu.dot_dimension_numbers<[1], [0], [0], [1], [0, 0, 1, 1], [], []>} : vector<128x8xbf16>, vector<8x128xbf16>, vector<128x128xf32> -> vector<128x128xf32>
    %c0_4 = arith.constant 0 : index
    %c0_5 = arith.constant 0 : index
    %5 = vector.load %arg4[%c0_4, %c0_5] : memref<1x128xf32, #tpu.memory_space<vmem>>, vector<1x128xf32>
    %6 = vector.broadcast %5 : vector<1x128xf32> to vector<128x128xf32>
    %7 = arith.addf %4, %6 : vector<128x128xf32>
    %cst_6 = arith.constant 0.000000e+00 : f32
    %8 = vector.broadcast %cst_6 : f32 to vector<128x128xf32>
    %9 = arith.maximumf %7, %8 : vector<128x128xf32>
    %10 = vector.shape_cast %9 : vector<128x128xf32> to vector<32x4x128xf32>
    %cst_7 = arith.constant dense<0xFF800000> : vector<32x128xf32>
    %11 = vector.multi_reduction <maximumf>, %10, %cst_7 [1] : vector<32x4x128xf32> to vector<32x128xf32>
    %12 = arith.truncf %11 : vector<32x128xf32> to vector<32x128xbf16>
    %c0_8 = arith.constant 0 : index
    %c0_9 = arith.constant 0 : index
    %13 = vector.load %arg5[%c0_8, %c0_9] : memref<128x384xbf16, #tpu.memory_space<vmem>>, vector<128x384xbf16>
    %cst_10 = arith.constant dense<0.000000e+00> : vector<32x384xf32>
    %14 = tpu.matmul %12, %13, %cst_10 {dimension_numbers = #tpu.dot_dimension_numbers<[1], [0], [0], [1], [0, 0, 1, 1], [], []>} : vector<32x128xbf16>, vector<128x384xbf16>, vector<32x384xf32> -> vector<32x384xf32>
    %c0_11 = arith.constant 0 : index
    %c0_12 = arith.constant 0 : index
    %15 = vector.load %arg6[%c0_11, %c0_12] : memref<1x384xf32, #tpu.memory_space<vmem>>, vector<1x384xf32>
    %16 = vector.broadcast %15 : vector<1x384xf32> to vector<32x384xf32>
    %17 = arith.addf %14, %16 : vector<32x384xf32>
    %c0_13 = arith.constant 0 : index
    %c0_14 = arith.constant 0 : index
    %18 = vector.load %arg2[%c0_13, %c0_14] : memref<32x3xf32, #tpu.memory_space<vmem>>, vector<32x3xf32>
    %c0_15 = arith.constant 0 : index
    %c0_16 = arith.constant 0 : index
    %19 = vector.load %arg7[%c0_15, %c0_16] : memref<3x128xf32, #tpu.memory_space<vmem>>, vector<3x128xf32>
    %cst_17 = arith.constant dense<0.000000e+00> : vector<32x128xf32>
    %20 = tpu.matmul %18, %19, %cst_17 {dimension_numbers = #tpu.dot_dimension_numbers<[1], [0], [0], [1], [0, 0, 1, 1], [], []>} : vector<32x3xf32>, vector<3x128xf32>, vector<32x128xf32> -> vector<32x128xf32>
    %c0_18 = arith.constant 0 : index
    %c0_19 = arith.constant 0 : index
    %21 = vector.load %arg8[%c0_18, %c0_19] : memref<32x128xf32, #tpu.memory_space<vmem>>, vector<32x128xf32>
    tpu.vector_store %arg8[%c0_18, %c0_19], %11 {strides = array<i32>} : memref<32x128xf32, #tpu.memory_space<vmem>>, vector<32x128xf32>,
    %22 = vector.extract_strided_slice %17 {offsets = [0, 0], sizes = [32, 128], strides = [1, 1]} : vector<32x384xf32> to vector<32x128xf32>
    %c0_20 = arith.constant 0 : index
    %c0_21 = arith.constant 0 : index
    %23 = vector.load %arg9[%c0_20, %c0_21] : memref<32x256xf32, #tpu.memory_space<vmem>>, vector<32x128xf32>
    tpu.vector_store %arg9[%c0_20, %c0_21], %22 {strides = array<i32>} : memref<32x256xf32, #tpu.memory_space<vmem>>, vector<32x128xf32>,
    %c0_22 = arith.constant 0 : index
    %c128 = arith.constant 128 : index
    %24 = vector.load %arg9[%c0_22, %c128] : memref<32x256xf32, #tpu.memory_space<vmem>>, vector<32x128xf32>
    tpu.vector_store %arg9[%c0_22, %c128], %20 {strides = array<i32>} : memref<32x256xf32, #tpu.memory_space<vmem>>, vector<32x128xf32>,
    %25 = vector.extract_strided_slice %17 {offsets = [0, 128], sizes = [32, 256], strides = [1, 1]} : vector<32x384xf32> to vector<32x256xf32>
    %c0_23 = arith.constant 0 : index
    %c0_24 = arith.constant 0 : index
    %26 = vector.load %arg10[%c0_23, %c0_24] : memref<32x384xf32, #tpu.memory_space<vmem>>, vector<32x256xf32>
    tpu.vector_store %arg10[%c0_23, %c0_24], %25 {strides = array<i32>} : memref<32x384xf32, #tpu.memory_space<vmem>>, vector<32x256xf32>,
    %c0_25 = arith.constant 0 : index
    %c256 = arith.constant 256 : index
    %27 = vector.load %arg10[%c0_25, %c256] : memref<32x384xf32, #tpu.memory_space<vmem>>, vector<32x128xf32>
    tpu.vector_store %arg10[%c0_25, %c256], %20 {strides = array<i32>} : memref<32x384xf32, #tpu.memory_space<vmem>>, vector<32x128xf32>,
    return
  }
  func.func @transform_0(%arg0: i32) -> (i32, i32, i32) {
    %c0_i32 = arith.constant 0 : i32
    %c0_i32_0 = arith.constant 0 : i32
    %c0_i32_1 = arith.constant 0 : i32
    return %arg0, %c0_i32, %c0_i32_0 : i32, i32, i32
  }
  func.func @transform_1(%arg0: i32) -> (i32, i32) {
    %c0_i32 = arith.constant 0 : i32
    %c0_i32_0 = arith.constant 0 : i32
    return %arg0, %c0_i32 : i32, i32
  }
  func.func @transform_2(%arg0: i32) -> (i32, i32) {
    %c0_i32 = arith.constant 0 : i32
    %c0_i32_0 = arith.constant 0 : i32
    %c0_i32_1 = arith.constant 0 : i32
    return %c0_i32, %c0_i32_0 : i32, i32
  }
  func.func @transform_3(%arg0: i32) -> (i32, i32) {
    %c0_i32 = arith.constant 0 : i32
    %c0_i32_0 = arith.constant 0 : i32
    %c0_i32_1 = arith.constant 0 : i32
    return %c0_i32, %c0_i32_0 : i32, i32
  }
  func.func @transform_4(%arg0: i32) -> (i32, i32) {
    %c0_i32 = arith.constant 0 : i32
    %c0_i32_0 = arith.constant 0 : i32
    %c0_i32_1 = arith.constant 0 : i32
    return %c0_i32, %c0_i32_0 : i32, i32
  }
  func.func @transform_5(%arg0: i32) -> (i32, i32) {
    %c0_i32 = arith.constant 0 : i32
    %c0_i32_0 = arith.constant 0 : i32
    %c0_i32_1 = arith.constant 0 : i32
    return %c0_i32, %c0_i32_0 : i32, i32
  }
  func.func @transform_6(%arg0: i32) -> (i32, i32) {
    %c0_i32 = arith.constant 0 : i32
    %c0_i32_0 = arith.constant 0 : i32
    %c0_i32_1 = arith.constant 0 : i32
    return %c0_i32, %c0_i32_0 : i32, i32
  }
  func.func @transform_7(%arg0: i32) -> (i32, i32) {
    %c0_i32 = arith.constant 0 : i32
    %c0_i32_0 = arith.constant 0 : i32
    return %arg0, %c0_i32 : i32, i32
  }
  func.func @transform_8(%arg0: i32) -> (i32, i32) {
    %c0_i32 = arith.constant 0 : i32
    %c0_i32_0 = arith.constant 0 : i32
    return %arg0, %c0_i32 : i32, i32
  }
  func.func @transform_9(%arg0: i32) -> (i32, i32) {
    %c0_i32 = arith.constant 0 : i32
    %c0_i32_0 = arith.constant 0 : i32
    return %arg0, %c0_i32 : i32, i32
  }
}

</mosaic_0001>

<llo_original>
// kernel: tpu_custom_call.1
$region0: #{tpu_custom_call.1}
  #allocation0 [shape = 'u32[]', space=smem, size = 0x4, offset = 0x4, fixed_abs, tag = 'smem constant byte address 0x4 - core index']
  #allocation1 [shape = 'u32[144,128]{1,0:T(1,128)}', space=vmem, size = 0x12000, scoped, tag = 'internal scratch']
  %s0 = inlined_call_operand.vmem [shape: f32[32,4,8], index: 0, kind: input, shape index: {}]
  %s1 = inlined_call_operand.vmem [shape: f32[32,3], index: 1, kind: input, shape index: {}]
  %s2 = inlined_call_operand.vmem [shape: bf16[8,128], index: 2, kind: input, shape index: {}]
  %s3 = inlined_call_operand.vmem [shape: f32[1,128], index: 3, kind: input, shape index: {}]
  %s4 = inlined_call_operand.vmem [shape: bf16[128,384], index: 4, kind: input, shape index: {}]
  %s5 = inlined_call_operand.vmem [shape: f32[1,384], index: 5, kind: input, shape index: {}]
  %s6 = inlined_call_operand.vmem [shape: f32[3,128], index: 6, kind: input, shape index: {}]
  %s7 = inlined_call_operand.hbm [shape: f32[32,128], index: 7, kind: output, shape index: {0}]
  %s8 = inlined_call_operand.hbm [shape: f32[32,256], index: 8, kind: output, shape index: {1}]
  %s9 = inlined_call_operand.hbm [shape: f32[32,384], index: 9, kind: output, shape index: {2}]
  %10 = xla_tuple %s7, %s8, %s9
  %s11 = sld [smem:[#allocation0]]
  $region54: #{tpu_custom_call.1} parent=0
    _
  %s13 = ssub.s32 1, %s11
  %s14 = scalar_select 0, %s13, %s11
  $region1: #{tpu_custom_call.1} parent=0
    #allocation2 [shape = 'u8[16384]{0}', space=vmem, size = 0x4000, scoped, tag = 'output window, operand 0, single buffered']
    #allocation3 [shape = 's32[1]{0}', space=sflag, size = 0x4, scoped, tag = 'scoped memory for tpu_custom_call.1']
    #allocation4 [shape = 'u8[32768]{0}', space=vmem, size = 0x8000, scoped, tag = 'output window, operand 1, single buffered']
    #allocation5 [shape = 's32[1]{0}', space=sflag, size = 0x4, scoped, tag = 'scoped memory for tpu_custom_call.1']
    #allocation6 [shape = 'u8[49152]{0}', space=vmem, size = 0xc000, scoped, tag = 'output window, operand 2, single buffered']
    %15 = vsyncpa [#allocation3], 0
    %16 = vsyncpa [#allocation5], 0
    // Predicated region
    $region2: #{tpu_custom_call.1} parent=1 // pred_check
      _
    $region3: #{tpu_custom_call.1} parent=1 // pred_check_branch
      %18 = sbr.rel (0) target = $region5
    $region4: #{tpu_custom_call.1} parent=1 // pred_region
      _
    $region5: #{tpu_custom_call.1} parent=1 // pred_fallthru
      _
    // Predicated region
    $region6: #{tpu_custom_call.1} parent=1 // pred_check
      _
    $region7: #{tpu_custom_call.1} parent=1 // pred_check_branch
      %20 = sbr.rel (0) target = $region9
    $region8: #{tpu_custom_call.1} parent=1 // pred_region
      _
    $region9: #{tpu_custom_call.1} parent=1 // pred_fallthru
      _
    // Predicated region
    $region10: #{tpu_custom_call.1} parent=1 // pred_check
      _
    $region11: #{tpu_custom_call.1} parent=1 // pred_check_branch
      %22 = sbr.rel (0) target = $region13
    $region12: #{tpu_custom_call.1} parent=1 // pred_region
      _
    $region13: #{tpu_custom_call.1} parent=1 // pred_fallthru
      _
    // Predicated region
    $region14: #{tpu_custom_call.1} parent=1 // pred_check
      _
    $region15: #{tpu_custom_call.1} parent=1 // pred_check_branch
      %24 = sbr.rel (0) target = $region17
    $region16: #{tpu_custom_call.1} parent=1 // pred_region
      _
    $region17: #{tpu_custom_call.1} parent=1 // pred_fallthru
      _
    // Predicated region
    $region18: #{tpu_custom_call.1} parent=1 // pred_check
      _
    $region19: #{tpu_custom_call.1} parent=1 // pred_check_branch
      %26 = sbr.rel (0) target = $region21
    $region20: #{tpu_custom_call.1} parent=1 // pred_region
      _
    $region21: #{tpu_custom_call.1} parent=1 // pred_fallthru
      _
    // Predicated region
    $region22: #{tpu_custom_call.1} parent=1 // pred_check
      _
    $region23: #{tpu_custom_call.1} parent=1 // pred_check_branch
      %28 = sbr.rel (0) target = $region25
    $region24: #{tpu_custom_call.1} parent=1 // pred_region
      _
    $region25: #{tpu_custom_call.1} parent=1 // pred_fallthru
      _
    // Predicated region
    $region26: #{tpu_custom_call.1} parent=1 // pred_check
      _
    $region27: #{tpu_custom_call.1} parent=1 // pred_check_branch
      %30 = sbr.rel (0) target = $region29
    $region28: #{tpu_custom_call.1} parent=1 // pred_region
      _
    $region29: #{tpu_custom_call.1} parent=1 // pred_fallthru
      _
    %v32 = vld [vmem:[%s0] sm:$0xf]
    %v33 = vld [vmem:[%s0 + $0x4] sm:$0xf]
    %v34 = vld [vmem:[%s0 + $0x8] sm:$0xf]
    %v35 = vld [vmem:[%s0 + $0xc] sm:$0xf]
    %v36 = vld [vmem:[%s0 + $0x10] sm:$0xf]
    %v37 = vld [vmem:[%s0 + $0x14] sm:$0xf]
    %v38 = vld [vmem:[%s0 + $0x18] sm:$0xf]
    %v39 = vld [vmem:[%s0 + $0x1c] sm:$0xf]
    %v40 = vld [vmem:[%s0 + $0x20] sm:$0xf]
    %v41 = vld [vmem:[%s0 + $0x24] sm:$0xf]
    %v42 = vld [vmem:[%s0 + $0x28] sm:$0xf]
    %v43 = vld [vmem:[%s0 + $0x2c] sm:$0xf]
    %v44 = vld [vmem:[%s0 + $0x30] sm:$0xf]
    %v45 = vld [vmem:[%s0 + $0x34] sm:$0xf]
    %v46 = vld [vmem:[%s0 + $0x38] sm:$0xf]
    %v47 = vld [vmem:[%s0 + $0x3c] sm:$0xf]
    %v48 = vld [vmem:[%s0 + $0x40] sm:$0xf]
    %v49 = vld [vmem:[%s0 + $0x44] sm:$0xf]
    %v50 = vld [vmem:[%s0 + $0x48] sm:$0xf]
    %v51 = vld [vmem:[%s0 + $0x4c] sm:$0xf]
    %v52 = vld [vmem:[%s0 + $0x50] sm:$0xf]
    %v53 = vld [vmem:[%s0 + $0x54] sm:$0xf]
    %v54 = vld [vmem:[%s0 + $0x58] sm:$0xf]
    %v55 = vld [vmem:[%s0 + $0x5c] sm:$0xf]
    %v56 = vld [vmem:[%s0 + $0x60] sm:$0xf]
    %v57 = vld [vmem:[%s0 + $0x64] sm:$0xf]
    %v58 = vld [vmem:[%s0 + $0x68] sm:$0xf]
    %v59 = vld [vmem:[%s0 + $0x6c] sm:$0xf]
    %v60 = vld [vmem:[%s0 + $0x70] sm:$0xf]
    %v61 = vld [vmem:[%s0 + $0x74] sm:$0xf]
    %v62 = vld [vmem:[%s0 + $0x78] sm:$0xf]
    %v63 = vld [vmem:[%s0 + $0x7c] sm:$0xf]
    %v96 = vcombine.low %v32, %v33
    %v97 = vcombine.low %v34, %v35
    %v98 = vcombine.low %v36, %v37
    %v99 = vcombine.low %v38, %v39
    %v100 = vcombine.low %v40, %v41
    %v101 = vcombine.low %v42, %v43
    %v102 = vcombine.low %v44, %v45
    %v103 = vcombine.low %v46, %v47
    %v104 = vcombine.low %v48, %v49
    %v105 = vcombine.low %v50, %v51
    %v106 = vcombine.low %v52, %v53
    %v107 = vcombine.low %v54, %v55
    %v108 = vcombine.low %v56, %v57
    %v109 = vcombine.low %v58, %v59
    %v110 = vcombine.low %v60, %v61
    %v111 = vcombine.low %v62, %v63
    %v128 = vpack.c.bf16 %v97, %v96
    %v129 = vpack.c.bf16 %v99, %v98
    %v130 = vpack.c.bf16 %v101, %v100
    %v131 = vpack.c.bf16 %v103, %v102
    %v132 = vpack.c.bf16 %v105, %v104
    %v133 = vpack.c.bf16 %v107, %v106
    %v134 = vpack.c.bf16 %v109, %v108
    %v135 = vpack.c.bf16 %v111, %v110
    %v136 = vld [vmem:[%s2] sm:$0xf]
    %v137 = vld [vmem:[%s3] sm:$0x1]
    %v139 = vlaneseq
    %v140 = vshrl.u32 %v139, 7
    %v141 = vsub.s32 0, %v140
    %v142 = vrot.slane %v137, %v141
    %vm144 = vcmask 64512
    %v146 = vsel %vm144, %v128, 0
    %v149 = vsel %vm144, %v129, 0
    %v152 = vsel %vm144, %v130, 0
    %v155 = vsel %vm144, %v131, 0
    %v158 = vsel %vm144, %v132, 0
    %v161 = vsel %vm144, %v133, 0
    %v164 = vsel %vm144, %v134, 0
    %v167 = vsel %vm144, %v135, 0
    %vm169 = vcmask 1043456
    %v171 = vsel %vm169, %v136, 0
    %173 = vmatprep.subr.bf16.mxu0 0
    %174 = vmatpush1.bf16.msra.mxu0 %v171
    %175 = vmatprep.subr.bf16.mxu0 0
    %176 = vmatpush1.bf16.msra.mxu0 0
    %177 = vmatprep.subr.bf16.mxu0 0
    %178 = vmatpush1.bf16.msra.mxu0 0
    %179 = vmatprep.subr.bf16.mxu0 0
    %180 = vmatpush1.bf16.msra.mxu0 0
    %181 = vmatprep.subr.bf16.mxu0 0
    %182 = vmatpush1.bf16.msra.mxu0 0
    %183 = vmatprep.subr.bf16.mxu0 0
    %184 = vmatpush1.bf16.msra.mxu0 0
    %185 = vmatprep.subr.bf16.mxu0 0
    %186 = vmatpush1.bf16.msra.mxu0 0
    %187 = vmatprep.subr.bf16.mxu0 0
    %188 = vmatpush1.bf16.msra.mxu0 0
    %189 = vmatprep.subr.bf16.mxu0 0
    %190 = vmatpush1.bf16.msra.mxu0 0
    %191 = vmatprep.subr.bf16.mxu0 0
    %192 = vmatpush1.bf16.msra.mxu0 0
    %193 = vmatprep.subr.bf16.mxu0 0
    %194 = vmatpush1.bf16.msra.mxu0 0
    %195 = vmatprep.subr.bf16.mxu0 0
    %196 = vmatpush1.bf16.msra.mxu0 0
    %197 = vmatprep.subr.bf16.mxu0 0
    %198 = vmatpush1.bf16.msra.mxu0 0
    %199 = vmatprep.subr.bf16.mxu0 0
    %200 = vmatpush1.bf16.msra.mxu0 0
    %201 = vmatprep.subr.bf16.mxu0 0
    %202 = vmatpush1.bf16.msra.mxu0 0
    %203 = vmatprep.subr.bf16.mxu0 0
    %204 = vmatpush1.bf16.msra.mxu0 0
    %205 = vmatprep.mubr.bf16.mxu0 0
    %206 = vmatmul.mubr.bf16.gmra.mrb[0].mxu0 %v146
    %v207 = vpop.f32.mrb[0].mxu0
    %v208 = vadd.f32 %v142, %v207
    %v209 = vpop.f32.mrb[0].mxu0
    %v210 = vpop.f32.mrb[0].mxu0
    %v211 = vadd.f32 %v142, %v210
    %v212 = vpop.f32.mrb[0].mxu0
    %213 = vmatprep.mubr.bf16.mxu0 0
    %214 = vmatmul.mubr.bf16.gmra.mrb[0].mxu0 %v149
    %v215 = vpop.f32.mrb[0].mxu0
    %v216 = vadd.f32 %v142, %v215
    %v217 = vpop.f32.mrb[0].mxu0
    %v218 = vpop.f32.mrb[0].mxu0
    %v219 = vadd.f32 %v142, %v218
    %v220 = vpop.f32.mrb[0].mxu0
    %221 = vmatprep.mubr.bf16.mxu0 0
    %222 = vmatmul.mubr.bf16.gmra.mrb[0].mxu0 %v152
    %v223 = vpop.f32.mrb[0].mxu0
    %v224 = vadd.f32 %v142, %v223
    %v225 = vpop.f32.mrb[0].mxu0
    %v226 = vpop.f32.mrb[0].mxu0
    %v227 = vadd.f32 %v142, %v226
    %v228 = vpop.f32.mrb[0].mxu0
    %229 = vmatprep.mubr.bf16.mxu0 0
    %230 = vmatmul.mubr.bf16.gmra.mrb[0].mxu0 %v155
    %v231 = vpop.f32.mrb[0].mxu0
    %v232 = vadd.f32 %v142, %v231
    %v233 = vpop.f32.mrb[0].mxu0
    %v234 = vpop.f32.mrb[0].mxu0
    %v235 = vadd.f32 %v142, %v234
    %v236 = vpop.f32.mrb[0].mxu0
    %237 = vmatprep.mubr.bf16.mxu0 0
    %238 = vmatmul.mubr.bf16.gmra.mrb[0].mxu0 %v158
    %v239 = vpop.f32.mrb[0].mxu0
    %v240 = vadd.f32 %v142, %v239
    %v241 = vpop.f32.mrb[0].mxu0
    %v242 = vpop.f32.mrb[0].mxu0
    %v243 = vadd.f32 %v142, %v242
    %v244 = vpop.f32.mrb[0].mxu0
    %245 = vmatprep.mubr.bf16.mxu0 0
    %246 = vmatmul.mubr.bf16.gmra.mrb[0].mxu0 %v161
    %v247 = vpop.f32.mrb[0].mxu0
    %v248 = vadd.f32 %v142, %v247
    %v249 = vpop.f32.mrb[0].mxu0
    %v250 = vpop.f32.mrb[0].mxu0
    %v251 = vadd.f32 %v142, %v250
    %v252 = vpop.f32.mrb[0].mxu0
    %253 = vmatprep.mubr.bf16.mxu0 0
    %254 = vmatmul.mubr.bf16.gmra.mrb[0].mxu0 %v164
    %v255 = vpop.f32.mrb[0].mxu0
    %v256 = vadd.f32 %v142, %v255
    %v257 = vpop.f32.mrb[0].mxu0
    %v258 = vpop.f32.mrb[0].mxu0
    %v259 = vadd.f32 %v142, %v258
    %v260 = vpop.f32.mrb[0].mxu0
    %261 = vmatprep.mubr.bf16.mxu0 0
    %262 = vmatmul.mubr.bf16.gmra.mrb[0].mxu0 %v167
    %v263 = vpop.f32.mrb[0].mxu0
    %v264 = vadd.f32 %v142, %v263
    %v265 = vpop.f32.mrb[0].mxu0
    %v266 = vpop.f32.mrb[0].mxu0
    %v267 = vadd.f32 %v142, %v266
    %v268 = vpop.f32.mrb[0].mxu0
    %269 = vdwg.mxu0
    %v270 = vmax.f32 %v208, 0.0
    %v271 = vmax.f32 %v211, 0.0
    %v272 = vmax.f32 %v216, 0.0
    %v273 = vmax.f32 %v219, 0.0
    %v274 = vmax.f32 %v224, 0.0
    %v275 = vmax.f32 %v227, 0.0
    %v276 = vmax.f32 %v232, 0.0
    %v277 = vmax.f32 %v235, 0.0
    %v278 = vmax.f32 %v240, 0.0
    %v279 = vmax.f32 %v243, 0.0
    %v280 = vmax.f32 %v248, 0.0
    %v281 = vmax.f32 %v251, 0.0
    %v282 = vmax.f32 %v256, 0.0
    %v283 = vmax.f32 %v259, 0.0
    %v284 = vmax.f32 %v264, 0.0
    %v285 = vmax.f32 %v267, 0.0
    %v302 = vcombine.high %v270, %v270
    %v303 = vcombine.high %v271, %v271
    %v304 = vcombine.high %v272, %v272
    %v305 = vcombine.high %v273, %v273
    %v306 = vcombine.high %v274, %v274
    %v307 = vcombine.high %v275, %v275
    %v308 = vcombine.high %v276, %v276
    %v309 = vcombine.high %v277, %v277
    %v310 = vcombine.high %v278, %v278
    %v311 = vcombine.high %v279, %v279
    %v312 = vcombine.high %v280, %v280
    %v313 = vcombine.high %v281, %v281
    %v314 = vcombine.high %v282, %v282
    %v315 = vcombine.high %v283, %v283
    %v316 = vcombine.high %v284, %v284
    %v317 = vcombine.high %v285, %v285
    %v334 = vsel %vm169, %v270, -inf
    %v335 = vrot.slane %v334, 4
    %v336 = vmax.f32 %v334, %v335
    %v337 = vrot.slane %v336, 2
    %v338 = vmax.f32 %v336, %v337
    %v339 = vrot.slane %v338, 1
    %v340 = vmax.f32 %v338, %v339
    %v341 = vsel %vm169, %v302, -inf
    %v342 = vrot.slane %v341, 4
    %v343 = vmax.f32 %v341, %v342
    %v344 = vrot.slane %v343, 2
    %v345 = vmax.f32 %v343, %v344
    %v346 = vrot.slane %v345, 1
    %v347 = vmax.f32 %v345, %v346
    %v348 = vsel %vm169, %v271, -inf
    %v349 = vrot.slane %v348, 4
    %v350 = vmax.f32 %v348, %v349
    %v351 = vrot.slane %v350, 2
    %v352 = vmax.f32 %v350, %v351
    %v353 = vrot.slane %v352, 1
    %v354 = vmax.f32 %v352, %v353
    %v355 = vsel %vm169, %v303, -inf
    %v356 = vrot.slane %v355, 4
    %v357 = vmax.f32 %v355, %v356
    %v358 = vrot.slane %v357, 2
    %v359 = vmax.f32 %v357, %v358
    %v360 = vrot.slane %v359, 1
    %v361 = vmax.f32 %v359, %v360
    %v362 = vsel %vm169, %v272, -inf
    %v363 = vrot.slane %v362, 4
    %v364 = vmax.f32 %v362, %v363
    %v365 = vrot.slane %v364, 2
    %v366 = vmax.f32 %v364, %v365
    %v367 = vrot.slane %v366, 1
    %v368 = vmax.f32 %v366, %v367
    %v369 = vsel %vm169, %v304, -inf
    %v370 = vrot.slane %v369, 4
    %v371 = vmax.f32 %v369, %v370
    %v372 = vrot.slane %v371, 2
    %v373 = vmax.f32 %v371, %v372
    %v374 = vrot.slane %v373, 1
    %v375 = vmax.f32 %v373, %v374
    %v376 = vsel %vm169, %v273, -inf
    %v377 = vrot.slane %v376, 4
    %v378 = vmax.f32 %v376, %v377
    %v379 = vrot.slane %v378, 2
    %v380 = vmax.f32 %v378, %v379
    %v381 = vrot.slane %v380, 1
    %v382 = vmax.f32 %v380, %v381
    %v383 = vsel %vm169, %v305, -inf
    %v384 = vrot.slane %v383, 4
    %v385 = vmax.f32 %v383, %v384
    %v386 = vrot.slane %v385, 2
    %v387 = vmax.f32 %v385, %v386
    %v388 = vrot.slane %v387, 1
    %v389 = vmax.f32 %v387, %v388
    %v390 = vsel %vm169, %v274, -inf
    %v391 = vrot.slane %v390, 4
    %v392 = vmax.f32 %v390, %v391
    %v393 = vrot.slane %v392, 2
    %v394 = vmax.f32 %v392, %v393
    %v395 = vrot.slane %v394, 1
    %v396 = vmax.f32 %v394, %v395
    %v397 = vsel %vm169, %v306, -inf
    %v398 = vrot.slane %v397, 4
    %v399 = vmax.f32 %v397, %v398
    %v400 = vrot.slane %v399, 2
    %v401 = vmax.f32 %v399, %v400
    %v402 = vrot.slane %v401, 1
    %v403 = vmax.f32 %v401, %v402
    %v404 = vsel %vm169, %v275, -inf
    %v405 = vrot.slane %v404, 4
    %v406 = vmax.f32 %v404, %v405
    %v407 = vrot.slane %v406, 2
    %v408 = vmax.f32 %v406, %v407
    %v409 = vrot.slane %v408, 1
    %v410 = vmax.f32 %v408, %v409
    %v411 = vsel %vm169, %v307, -inf
    %v412 = vrot.slane %v411, 4
    %v413 = vmax.f32 %v411, %v412
    %v414 = vrot.slane %v413, 2
    %v415 = vmax.f32 %v413, %v414
    %v416 = vrot.slane %v415, 1
    %v417 = vmax.f32 %v415, %v416
    %v418 = vsel %vm169, %v276, -inf
    %v419 = vrot.slane %v418, 4
    %v420 = vmax.f32 %v418, %v419
    %v421 = vrot.slane %v420, 2
    %v422 = vmax.f32 %v420, %v421
    %v423 = vrot.slane %v422, 1
    %v424 = vmax.f32 %v422, %v423
    %v425 = vsel %vm169, %v308, -inf
    %v426 = vrot.slane %v425, 4
    %v427 = vmax.f32 %v425, %v426
    %v428 = vrot.slane %v427, 2
    %v429 = vmax.f32 %v427, %v428
    %v430 = vrot.slane %v429, 1
    %v431 = vmax.f32 %v429, %v430
    %v432 = vsel %vm169, %v277, -inf
    %v433 = vrot.slane %v432, 4
    %v434 = vmax.f32 %v432, %v433
    %v435 = vrot.slane %v434, 2
    %v436 = vmax.f32 %v434, %v435
    %v437 = vrot.slane %v436, 1
    %v438 = vmax.f32 %v436, %v437
    %v439 = vsel %vm169, %v309, -inf
    %v440 = vrot.slane %v439, 4
    %v441 = vmax.f32 %v439, %v440
    %v442 = vrot.slane %v441, 2
    %v443 = vmax.f32 %v441, %v442
    %v444 = vrot.slane %v443, 1
    %v445 = vmax.f32 %v443, %v444
    %v446 = vsel %vm169, %v278, -inf
    %v447 = vrot.slane %v446, 4
    %v448 = vmax.f32 %v446, %v447
    %v449 = vrot.slane %v448, 2
    %v450 = vmax.f32 %v448, %v449
    %v451 = vrot.slane %v450, 1
    %v452 = vmax.f32 %v450, %v451
    %v453 = vsel %vm169, %v310, -inf
    %v454 = vrot.slane %v453, 4
    %v455 = vmax.f32 %v453, %v454
    %v456 = vrot.slane %v455, 2
    %v457 = vmax.f32 %v455, %v456
    %v458 = vrot.slane %v457, 1
    %v459 = vmax.f32 %v457, %v458
    %v460 = vsel %vm169, %v279, -inf
    %v461 = vrot.slane %v460, 4
    %v462 = vmax.f32 %v460, %v461
    %v463 = vrot.slane %v462, 2
    %v464 = vmax.f32 %v462, %v463
    %v465 = vrot.slane %v464, 1
    %v466 = vmax.f32 %v464, %v465
    %v467 = vsel %vm169, %v311, -inf
    %v468 = vrot.slane %v467, 4
    %v469 = vmax.f32 %v467, %v468
    %v470 = vrot.slane %v469, 2
    %v471 = vmax.f32 %v469, %v470
    %v472 = vrot.slane %v471, 1
    %v473 = vmax.f32 %v471, %v472
    %v474 = vsel %vm169, %v280, -inf
    %v475 = vrot.slane %v474, 4
    %v476 = vmax.f32 %v474, %v475
    %v477 = vrot.slane %v476, 2
    %v478 = vmax.f32 %v476, %v477
    %v479 = vrot.slane %v478, 1
    %v480 = vmax.f32 %v478, %v479
    %v481 = vsel %vm169, %v312, -inf
    %v482 = vrot.slane %v481, 4
    %v483 = vmax.f32 %v481, %v482
    %v484 = vrot.slane %v483, 2
    %v485 = vmax.f32 %v483, %v484
    %v486 = vrot.slane %v485, 1
    %v487 = vmax.f32 %v485, %v486
    %v488 = vsel %vm169, %v281, -inf
    %v489 = vrot.slane %v488, 4
    %v490 = vmax.f32 %v488, %v489
    %v491 = vrot.slane %v490, 2
    %v492 = vmax.f32 %v490, %v491
    %v493 = vrot.slane %v492, 1
    %v494 = vmax.f32 %v492, %v493
    %v495 = vsel %vm169, %v313, -inf
    %v496 = vrot.slane %v495, 4
    %v497 = vmax.f32 %v495, %v496
    %v498 = vrot.slane %v497, 2
    %v499 = vmax.f32 %v497, %v498
    %v500 = vrot.slane %v499, 1
    %v501 = vmax.f32 %v499, %v500
    %v502 = vsel %vm169, %v282, -inf
    %v503 = vrot.slane %v502, 4
    %v504 = vmax.f32 %v502, %v503
    %v505 = vrot.slane %v504, 2
    %v506 = vmax.f32 %v504, %v505
    %v507 = vrot.slane %v506, 1
    %v508 = vmax.f32 %v506, %v507
    %v509 = vsel %vm169, %v314, -inf
    %v510 = vrot.slane %v509, 4
    %v511 = vmax.f32 %v509, %v510
    %v512 = vrot.slane %v511, 2
    %v513 = vmax.f32 %v511, %v512
    %v514 = vrot.slane %v513, 1
    %v515 = vmax.f32 %v513, %v514
    %v516 = vsel %vm169, %v283, -inf
    %v517 = vrot.slane %v516, 4
    %v518 = vmax.f32 %v516, %v517
    %v519 = vrot.slane %v518, 2
    %v520 = vmax.f32 %v518, %v519
    %v521 = vrot.slane %v520, 1
    %v522 = vmax.f32 %v520, %v521
    %v523 = vsel %vm169, %v315, -inf
    %v524 = vrot.slane %v523, 4
    %v525 = vmax.f32 %v523, %v524
    %v526 = vrot.slane %v525, 2
    %v527 = vmax.f32 %v525, %v526
    %v528 = vrot.slane %v527, 1
    %v529 = vmax.f32 %v527, %v528
    %v530 = vsel %vm169, %v284, -inf
    %v531 = vrot.slane %v530, 4
    %v532 = vmax.f32 %v530, %v531
    %v533 = vrot.slane %v532, 2
    %v534 = vmax.f32 %v532, %v533
    %v535 = vrot.slane %v534, 1
    %v536 = vmax.f32 %v534, %v535
    %v537 = vsel %vm169, %v316, -inf
    %v538 = vrot.slane %v537, 4
    %v539 = vmax.f32 %v537, %v538
    %v540 = vrot.slane %v539, 2
    %v541 = vmax.f32 %v539, %v540
    %v542 = vrot.slane %v541, 1
    %v543 = vmax.f32 %v541, %v542
    %v544 = vsel %vm169, %v285, -inf
    %v545 = vrot.slane %v544, 4
    %v546 = vmax.f32 %v544, %v545
    %v547 = vrot.slane %v546, 2
    %v548 = vmax.f32 %v546, %v547
    %v549 = vrot.slane %v548, 1
    %v550 = vmax.f32 %v548, %v549
    %v551 = vsel %vm169, %v317, -inf
    %v552 = vrot.slane %v551, 4
    %v553 = vmax.f32 %v551, %v552
    %v554 = vrot.slane %v553, 2
    %v555 = vmax.f32 %v553, %v554
    %v556 = vrot.slane %v555, 1
    %v557 = vmax.f32 %v555, %v556
    %v558 = vpack.c.bf16 %v340, %v340
    %v559 = vpack.c.bf16 %v347, %v347
    %v560 = vpack.c.bf16 %v354, %v354
    %v561 = vpack.c.bf16 %v361, %v361
    %v562 = vpack.c.bf16 %v368, %v368
    %v563 = vpack.c.bf16 %v375, %v375
    %v564 = vpack.c.bf16 %v382, %v382
    %v565 = vpack.c.bf16 %v389, %v389
    %v566 = vpack.c.bf16 %v396, %v396
    %v567 = vpack.c.bf16 %v403, %v403
    %v568 = vpack.c.bf16 %v410, %v410
    %v569 = vpack.c.bf16 %v417, %v417
    %v570 = vpack.c.bf16 %v424, %v424
    %v571 = vpack.c.bf16 %v431, %v431
    %v572 = vpack.c.bf16 %v438, %v438
    %v573 = vpack.c.bf16 %v445, %v445
    %v574 = vpack.c.bf16 %v452, %v452
    %v575 = vpack.c.bf16 %v459, %v459
    %v576 = vpack.c.bf16 %v466, %v466
    %v577 = vpack.c.bf16 %v473, %v473
    %v578 = vpack.c.bf16 %v480, %v480
    %v579 = vpack.c.bf16 %v487, %v487
    %v580 = vpack.c.bf16 %v494, %v494
    %v581 = vpack.c.bf16 %v501, %v501
    %v582 = vpack.c.bf16 %v508, %v508
    %v583 = vpack.c.bf16 %v515, %v515
    %v584 = vpack.c.bf16 %v522, %v522
    %v585 = vpack.c.bf16 %v529, %v529
    %v586 = vpack.c.bf16 %v536, %v536
    %v587 = vpack.c.bf16 %v543, %v543
    %v588 = vpack.c.bf16 %v550, %v550
    %v589 = vpack.c.bf16 %v557, %v557
    %v590 = vld [vmem:[%s4] sm:$0xff]
    %v591 = vld [vmem:[%s4 + $0x8] sm:$0xf]
    %v592 = vld [vmem:[%s4 + $0xc] sm:$0xff]
    %v593 = vld [vmem:[%s4 + $0x14] sm:$0xf]
    %v594 = vld [vmem:[%s4 + $0x18] sm:$0xff]
    %v595 = vld [vmem:[%s4 + $0x20] sm:$0xf]
    %v596 = vld [vmem:[%s4 + $0x24] sm:$0xff]
    %v597 = vld [vmem:[%s4 + $0x2c] sm:$0xf]
    %v598 = vld [vmem:[%s4 + $0x30] sm:$0xff]
    %v599 = vld [vmem:[%s4 + $0x38] sm:$0xf]
    %v600 = vld [vmem:[%s4 + $0x3c] sm:$0xff]
    %v601 = vld [vmem:[%s4 + $0x44] sm:$0xf]
    %v602 = vld [vmem:[%s4 + $0x48] sm:$0xff]
    %v603 = vld [vmem:[%s4 + $0x50] sm:$0xf]
    %v604 = vld [vmem:[%s4 + $0x54] sm:$0xff]
    %v605 = vld [vmem:[%s4 + $0x5c] sm:$0xf]
    %v606 = vld [vmem:[%s4 + $0x60] sm:$0xff]
    %v607 = vld [vmem:[%s4 + $0x68] sm:$0xf]
    %v608 = vld [vmem:[%s4 + $0x6c] sm:$0xff]
    %v609 = vld [vmem:[%s4 + $0x74] sm:$0xf]
    %v610 = vld [vmem:[%s4 + $0x78] sm:$0xff]
    %v611 = vld [vmem:[%s4 + $0x80] sm:$0xf]
    %v612 = vld [vmem:[%s4 + $0x84] sm:$0xff]
    %v613 = vld [vmem:[%s4 + $0x8c] sm:$0xf]
    %v614 = vld [vmem:[%s4 + $0x90] sm:$0xff]
    %v615 = vld [vmem:[%s4 + $0x98] sm:$0xf]
    %v616 = vld [vmem:[%s4 + $0x9c] sm:$0xff]
    %v617 = vld [vmem:[%s4 + $0xa4] sm:$0xf]
    %v618 = vld [vmem:[%s4 + $0xa8] sm:$0xff]
    %v619 = vld [vmem:[%s4 + $0xb0] sm:$0xf]
    %v620 = vld [vmem:[%s4 + $0xb4] sm:$0xff]
    %v621 = vld [vmem:[%s4 + $0xbc] sm:$0xf]
    %v622 = vld [vmem:[%s5] sm:$0x7]
    %v624 = vlaneseq
    %v625 = vshrl.u32 %v624, 7
    %v626 = vsub.s32 0, %v625
    %v627 = vrot.slane %v622, %v626
    %v628 = vlaneseq
    %v629 = vshrl.u32 %v628, 7
    %v630 = vsub.s32 1, %v629
    %v631 = vrot.slane %v622, %v630
    %v632 = vlaneseq
    %v633 = vshrl.u32 %v632, 7
    %v634 = vsub.s32 2, %v633
    %v635 = vrot.slane %v622, %v634
    %v671 = vunpack.c.l.b16 %v558
    %v672 = vunpack.c.l.b16 %v559
    %v673 = vunpack.c.l.b16 %v560
    %v674 = vunpack.c.l.b16 %v561
    %v675 = vunpack.c.l.b16 %v562
    %v676 = vunpack.c.l.b16 %v563
    %v677 = vunpack.c.l.b16 %v564
    %v678 = vunpack.c.l.b16 %v565
    %v679 = vunpack.c.l.b16 %v566
    %v680 = vunpack.c.l.b16 %v567
    %v681 = vunpack.c.l.b16 %v568
    %v682 = vunpack.c.l.b16 %v569
    %v683 = vunpack.c.l.b16 %v570
    %v684 = vunpack.c.l.b16 %v571
    %v685 = vunpack.c.l.b16 %v572
    %v686 = vunpack.c.l.b16 %v573
    %v687 = vunpack.c.l.b16 %v574
    %v688 = vunpack.c.l.b16 %v575
    %v689 = vunpack.c.l.b16 %v576
    %v690 = vunpack.c.l.b16 %v577
    %v691 = vunpack.c.l.b16 %v578
    %v692 = vunpack.c.l.b16 %v579
    %v693 = vunpack.c.l.b16 %v580
    %v694 = vunpack.c.l.b16 %v581
    %v695 = vunpack.c.l.b16 %v582
    %v696 = vunpack.c.l.b16 %v583
    %v697 = vunpack.c.l.b16 %v584
    %v698 = vunpack.c.l.b16 %v585
    %v699 = vunpack.c.l.b16 %v586
    %v700 = vunpack.c.l.b16 %v587
    %v701 = vunpack.c.l.b16 %v588
    %v702 = vunpack.c.l.b16 %v589
    %vm703 = vcmask 1041409
    %v704 = vsel %vm703, %v672, %v671
    %vm705 = vcmask 1042434
    %v706 = vsel %vm705, %v673, %v704
    %vm707 = vcmask 1043459
    %v708 = vsel %vm707, %v674, %v706
    %vm709 = vcmask 1044484
    %v710 = vsel %vm709, %v675, %v708
    %vm711 = vcmask 1045509
    %v712 = vsel %vm711, %v676, %v710
    %vm713 = vcmask 1046534
    %v714 = vsel %vm713, %v677, %v712
    %vm715 = vcmask 1047559
    %v716 = vsel %vm715, %v678, %v714
    %v717 = vsel %vm703, %v680, %v679
    %v718 = vsel %vm705, %v681, %v717
    %v719 = vsel %vm707, %v682, %v718
    %v720 = vsel %vm709, %v683, %v719
    %v721 = vsel %vm711, %v684, %v720
    %v722 = vsel %vm713, %v685, %v721
    %v723 = vsel %vm715, %v686, %v722
    %v724 = vsel %vm703, %v688, %v687
    %v725 = vsel %vm705, %v689, %v724
    %v726 = vsel %vm707, %v690, %v725
    %v727 = vsel %vm709, %v691, %v726
    %v728 = vsel %vm711, %v692, %v727
    %v729 = vsel %vm713, %v693, %v728
    %v730 = vsel %vm715, %v694, %v729
    %v731 = vsel %vm703, %v696, %v695
    %v732 = vsel %vm705, %v697, %v731
    %v733 = vsel %vm707, %v698, %v732
    %v734 = vsel %vm709, %v699, %v733
    %v735 = vsel %vm711, %v700, %v734
    %v736 = vsel %vm713, %v701, %v735
    %v737 = vsel %vm715, %v702, %v736
    %v738 = vpack.c.b16 %v723, %v716
    %v739 = vpack.c.b16 %v737, %v730
    %v774 = vunpack.c.l.b16 %v590
    %v775 = vunpack.c.h.b16 %v590
    %v776 = vunpack.c.l.b16 %v591
    %v777 = vunpack.c.l.b16 %v592
    %v778 = vunpack.c.h.b16 %v592
    %v779 = vunpack.c.l.b16 %v593
    %v780 = vunpack.c.l.b16 %v594
    %v781 = vunpack.c.h.b16 %v594
    %v782 = vunpack.c.l.b16 %v595
    %v783 = vunpack.c.l.b16 %v596
    %v784 = vunpack.c.h.b16 %v596
    %v785 = vunpack.c.l.b16 %v597
    %v786 = vunpack.c.l.b16 %v598
    %v787 = vunpack.c.h.b16 %v598
    %v788 = vunpack.c.l.b16 %v599
    %v789 = vunpack.c.l.b16 %v600
    %v790 = vunpack.c.h.b16 %v600
    %v791 = vunpack.c.l.b16 %v601
    %v792 = vunpack.c.l.b16 %v602
    %v793 = vunpack.c.h.b16 %v602
    %v794 = vunpack.c.l.b16 %v603
    %v795 = vunpack.c.l.b16 %v604
    %v796 = vunpack.c.h.b16 %v604
    %v797 = vunpack.c.l.b16 %v605
    %v798 = vunpack.c.l.b16 %v606
    %v799 = vunpack.c.h.b16 %v606
    %v800 = vunpack.c.l.b16 %v607
    %v801 = vunpack.c.l.b16 %v608
    %v802 = vunpack.c.h.b16 %v608
    %v803 = vunpack.c.l.b16 %v609
    %v804 = vunpack.c.l.b16 %v610
    %v805 = vunpack.c.h.b16 %v610
    %v806 = vunpack.c.l.b16 %v611
    %v807 = vunpack.c.l.b16 %v612
    %v808 = vunpack.c.h.b16 %v612
    %v809 = vunpack.c.l.b16 %v613
    %v810 = vunpack.c.l.b16 %v614
    %v811 = vunpack.c.h.b16 %v614
    %v812 = vunpack.c.l.b16 %v615
    %v813 = vunpack.c.l.b16 %v616
    %v814 = vunpack.c.h.b16 %v616
    %v815 = vunpack.c.l.b16 %v617
    %v816 = vunpack.c.l.b16 %v618
    %v817 = vunpack.c.h.b16 %v618
    %v818 = vunpack.c.l.b16 %v619
    %v819 = vunpack.c.l.b16 %v620
    %v820 = vunpack.c.h.b16 %v620
    %v821 = vunpack.c.l.b16 %v621
    %v822 = vpack.c.b16 %v777, %v774
    %v823 = vpack.c.b16 %v778, %v775
    %v824 = vpack.c.b16 %v779, %v776
    %v825 = vpack.c.b16 %v783, %v780
    %v826 = vpack.c.b16 %v784, %v781
    %v827 = vpack.c.b16 %v785, %v782
    %v828 = vpack.c.b16 %v789, %v786
    %v829 = vpack.c.b16 %v790, %v787
    %v830 = vpack.c.b16 %v791, %v788
    %v831 = vpack.c.b16 %v795, %v792
    %v832 = vpack.c.b16 %v796, %v793
    %v833 = vpack.c.b16 %v797, %v794
    %v834 = vpack.c.b16 %v801, %v798
    %v835 = vpack.c.b16 %v802, %v799
    %v836 = vpack.c.b16 %v803, %v800
    %v837 = vpack.c.b16 %v807, %v804
    %v838 = vpack.c.b16 %v808, %v805
    %v839 = vpack.c.b16 %v809, %v806
    %v840 = vpack.c.b16 %v813, %v810
    %v841 = vpack.c.b16 %v814, %v811
    %v842 = vpack.c.b16 %v815, %v812
    %v843 = vpack.c.b16 %v819, %v816
    %v844 = vpack.c.b16 %v820, %v817
    %v845 = vpack.c.b16 %v821, %v818
    %870 = vmatprep.subr.bf16.mxu0 %v823
    %871 = vmatpush1.bf16.msra.mxu0 %v822
    %872 = vmatprep.subr.bf16.mxu0 %v826
    %873 = vmatpush1.bf16.msra.mxu0 %v825
    %874 = vmatprep.subr.bf16.mxu0 %v829
    %875 = vmatpush1.bf16.msra.mxu0 %v828
    %876 = vmatprep.subr.bf16.mxu0 %v832
    %877 = vmatpush1.bf16.msra.mxu0 %v831
    %878 = vmatprep.subr.bf16.mxu0 %v835
    %879 = vmatpush1.bf16.msra.mxu0 %v834
    %880 = vmatprep.subr.bf16.mxu0 %v838
    %881 = vmatpush1.bf16.msra.mxu0 %v837
    %882 = vmatprep.subr.bf16.mxu0 %v841
    %883 = vmatpush1.bf16.msra.mxu0 %v840
    %884 = vmatprep.subr.bf16.mxu0 %v844
    %885 = vmatpush1.bf16.msra.mxu0 %v843
    %886 = vmatprep.subr.bf16.mxu0 0
    %887 = vmatpush1.bf16.msra.mxu0 0
    %888 = vmatprep.subr.bf16.mxu0 0
    %889 = vmatpush1.bf16.msra.mxu0 0
    %890 = vmatprep.subr.bf16.mxu0 0
    %891 = vmatpush1.bf16.msra.mxu0 0
    %892 = vmatprep.subr.bf16.mxu0 0
    %893 = vmatpush1.bf16.msra.mxu0 0
    %894 = vmatprep.subr.bf16.mxu0 0
    %895 = vmatpush1.bf16.msra.mxu0 0
    %896 = vmatprep.subr.bf16.mxu0 0
    %897 = vmatpush1.bf16.msra.mxu0 0
    %898 = vmatprep.subr.bf16.mxu0 0
    %899 = vmatpush1.bf16.msra.mxu0 0
    %900 = vmatprep.subr.bf16.mxu0 0
    %901 = vmatpush1.bf16.msra.mxu0 0
    %902 = vmatprep.mubr.bf16.mxu0 0
    %903 = vmatmul.mubr.bf16.gmra.mrb[0].mxu0 %v738
    %v904 = vpop.f32.mrb[0].mxu0
    %v905 = vadd.f32 %v627, %v904
    %v906 = vpop.f32.mrb[0].mxu0
    %v907 = vadd.f32 %v631, %v906
    %v908 = vpop.f32.mrb[0].mxu0
    %v909 = vadd.f32 %v627, %v908
    %v910 = vpop.f32.mrb[0].mxu0
    %v911 = vadd.f32 %v631, %v910
    %912 = vmatprep.mubr.bf16.mxu0 0
    %913 = vmatmul.mubr.bf16.gmra.mrb[0].mxu0 %v739
    %v914 = vpop.f32.mrb[0].mxu0
    %v915 = vadd.f32 %v627, %v914
    %v916 = vpop.f32.mrb[0].mxu0
    %v917 = vadd.f32 %v631, %v916
    %v918 = vpop.f32.mrb[0].mxu0
    %v919 = vadd.f32 %v627, %v918
    %v920 = vpop.f32.mrb[0].mxu0
    %v921 = vadd.f32 %v631, %v920
    %922 = vdwg.mxu0
    %923 = vmatprep.subr.bf16.mxu0 0
    %924 = vmatpush1.bf16.msra.mxu0 %v824
    %925 = vmatprep.subr.bf16.mxu0 0
    %926 = vmatpush1.bf16.msra.mxu0 %v827
    %927 = vmatprep.subr.bf16.mxu0 0
    %928 = vmatpush1.bf16.msra.mxu0 %v830
    %929 = vmatprep.subr.bf16.mxu0 0
    %930 = vmatpush1.bf16.msra.mxu0 %v833
    %931 = vmatprep.subr.bf16.mxu0 0
    %932 = vmatpush1.bf16.msra.mxu0 %v836
    %933 = vmatprep.subr.bf16.mxu0 0
    %934 = vmatpush1.bf16.msra.mxu0 %v839
    %935 = vmatprep.subr.bf16.mxu0 0
    %936 = vmatpush1.bf16.msra.mxu0 %v842
    %937 = vmatprep.subr.bf16.mxu0 0
    %938 = vmatpush1.bf16.msra.mxu0 %v845
    %939 = vmatprep.subr.bf16.mxu0 0
    %940 = vmatpush1.bf16.msra.mxu0 0
    %941 = vmatprep.subr.bf16.mxu0 0
    %942 = vmatpush1.bf16.msra.mxu0 0
    %943 = vmatprep.subr.bf16.mxu0 0
    %944 = vmatpush1.bf16.msra.mxu0 0
    %945 = vmatprep.subr.bf16.mxu0 0
    %946 = vmatpush1.bf16.msra.mxu0 0
    %947 = vmatprep.subr.bf16.mxu0 0
    %948 = vmatpush1.bf16.msra.mxu0 0
    %949 = vmatprep.subr.bf16.mxu0 0
    %950 = vmatpush1.bf16.msra.mxu0 0
    %951 = vmatprep.subr.bf16.mxu0 0
    %952 = vmatpush1.bf16.msra.mxu0 0
    %953 = vmatprep.subr.bf16.mxu0 0
    %954 = vmatpush1.bf16.msra.mxu0 0
    %955 = vmatprep.mubr.bf16.mxu0 0
    %956 = vmatmul.mubr.bf16.gmra.mrb[0].mxu0 %v738
    %v957 = vpop.f32.mrb[0].mxu0
    %v958 = vadd.f32 %v635, %v957
    %v959 = vpop.f32.mrb[0].mxu0
    %v960 = vpop.f32.mrb[0].mxu0
    %v961 = vadd.f32 %v635, %v960
    %v962 = vpop.f32.mrb[0].mxu0
    %963 = vmatprep.mubr.bf16.mxu0 0
    %964 = vmatmul.mubr.bf16.gmra.mrb[0].mxu0 %v739
    %v965 = vpop.f32.mrb[0].mxu0
    %v966 = vadd.f32 %v635, %v965
    %v967 = vpop.f32.mrb[0].mxu0
    %v968 = vpop.f32.mrb[0].mxu0
    %v969 = vadd.f32 %v635, %v968
    %v970 = vpop.f32.mrb[0].mxu0
    %971 = vdwg.mxu0
    %v972 = vld [vmem:[%s1] sm:$0xff]
    %v973 = vld [vmem:[%s1 + $0x8] sm:$0xff]
    %v974 = vld [vmem:[%s1 + $0x10] sm:$0xff]
    %v975 = vld [vmem:[%s1 + $0x18] sm:$0xff]
    %v976 = vld [vmem:[%s6] sm:$0x7]
    %vm977 = vcmask 23552
    %v979 = vsel %vm977, %v972, 0
    %v982 = vsel %vm977, %v973, 0
    %v985 = vsel %vm977, %v974, 0
    %v988 = vsel %vm977, %v975, 0
    %vm990 = vcmask 1042432
    %v992 = vsel %vm990, %v976, 0
    %994 = vmatprep.subr.mxu0 0.0
    %995 = vmatpush1.msra.mxu0 %v992
    %996 = vmatprep.subr.mxu0 0.0
    %997 = vmatpush1.msra.mxu0 0.0
    %998 = vmatprep.subr.mxu0 0.0
    %999 = vmatpush1.msra.mxu0 0.0
    %1000 = vmatprep.subr.mxu0 0.0
    %1001 = vmatpush1.msra.mxu0 0.0
    %1002 = vmatprep.subr.mxu0 0.0
    %1003 = vmatpush1.msra.mxu0 0.0
    %1004 = vmatprep.subr.mxu0 0.0
    %1005 = vmatpush1.msra.mxu0 0.0
    %1006 = vmatprep.subr.mxu0 0.0
    %1007 = vmatpush1.msra.mxu0 0.0
    %1008 = vmatprep.subr.mxu0 0.0
    %1009 = vmatpush1.msra.mxu0 0.0
    %1010 = vmatprep.subr.mxu0 0.0
    %1011 = vmatpush1.msra.mxu0 0.0
    %1012 = vmatprep.subr.mxu0 0.0
    %1013 = vmatpush1.msra.mxu0 0.0
    %1014 = vmatprep.subr.mxu0 0.0
    %1015 = vmatpush1.msra.mxu0 0.0
    %1016 = vmatprep.subr.mxu0 0.0
    %1017 = vmatpush1.msra.mxu0 0.0
    %1018 = vmatprep.subr.mxu0 0.0
    %1019 = vmatpush1.msra.mxu0 0.0
    %1020 = vmatprep.subr.mxu0 0.0
    %1021 = vmatpush1.msra.mxu0 0.0
    %1022 = vmatprep.subr.mxu0 0.0
    %1023 = vmatpush1.msra.mxu0 0.0
    %1024 = vmatprep.subr.mxu0 0.0
    %1025 = vmatpush1.msra.mxu0 0.0
    %1026 = vmatprep.subr.mxu0 0.0
    %1027 = vmatpush1.msra.mxu0 0.0
    %1028 = vmatprep.subr.mxu0 0.0
    %1029 = vmatpush1.msra.mxu0 0.0
    %1030 = vmatprep.subr.mxu0 0.0
    %1031 = vmatpush1.msra.mxu0 0.0
    %1032 = vmatprep.subr.mxu0 0.0
    %1033 = vmatpush1.msra.mxu0 0.0
    %1034 = vmatprep.subr.mxu0 0.0
    %1035 = vmatpush1.msra.mxu0 0.0
    %1036 = vmatprep.subr.mxu0 0.0
    %1037 = vmatpush1.msra.mxu0 0.0
    %1038 = vmatprep.subr.mxu0 0.0
    %1039 = vmatpush1.msra.mxu0 0.0
    %1040 = vmatprep.subr.mxu0 0.0
    %1041 = vmatpush1.msra.mxu0 0.0
    %1042 = vmatprep.subr.mxu0 0.0
    %1043 = vmatpush1.msra.mxu0 0.0
    %1044 = vmatprep.subr.mxu0 0.0
    %1045 = vmatpush1.msra.mxu0 0.0
    %1046 = vmatprep.subr.mxu0 0.0
    %1047 = vmatpush1.msra.mxu0 0.0
    %1048 = vmatprep.subr.mxu0 0.0
    %1049 = vmatpush1.msra.mxu0 0.0
    %1050 = vmatprep.subr.mxu0 0.0
    %1051 = vmatpush1.msra.mxu0 0.0
    %1052 = vmatprep.subr.mxu0 0.0
    %1053 = vmatpush1.msra.mxu0 0.0
    %1054 = vmatprep.subr.mxu0 0.0
    %1055 = vmatpush1.msra.mxu0 0.0
    %1056 = vmatprep.subr.mxu0 0.0
    %1057 = vmatpush1.msra.mxu0 0.0
    %1058 = vmatprep.mubr.f32.mxu0 0.0
    %1059 = vmatmul.mubr.f32.gmra.mrb[0].mxu0 %v979
    %v1060 = vpop.f32.mrb[0].mxu0
    %v1061 = vadd.f32 0.0, %v1060
    %v1062 = vpop.f32.mrb[0].mxu0
    %1063 = vmatprep.mubr.f32.mxu0 0.0
    %1064 = vmatmul.mubr.f32.gmra.mrb[0].mxu0 %v982
    %v1065 = vpop.f32.mrb[0].mxu0
    %v1066 = vadd.f32 0.0, %v1065
    %v1067 = vpop.f32.mrb[0].mxu0
    %1068 = vmatprep.mubr.f32.mxu0 0.0
    %1069 = vmatmul.mubr.f32.gmra.mrb[0].mxu0 %v985
    %v1070 = vpop.f32.mrb[0].mxu0
    %v1071 = vadd.f32 0.0, %v1070
    %v1072 = vpop.f32.mrb[0].mxu0
    %1073 = vmatprep.mubr.f32.mxu0 0.0
    %1074 = vmatmul.mubr.f32.gmra.mrb[0].mxu0 %v988
    %v1075 = vpop.f32.mrb[0].mxu0
    %v1076 = vadd.f32 0.0, %v1075
    %v1077 = vpop.f32.mrb[0].mxu0
    %1078 = vdwg.mxu0
    %v1111 = vsel %vm703, %v347, %v340
    %v1112 = vsel %vm705, %v354, %v1111
    %v1113 = vsel %vm707, %v361, %v1112
    %v1114 = vsel %vm709, %v368, %v1113
    %v1115 = vsel %vm711, %v375, %v1114
    %v1116 = vsel %vm713, %v382, %v1115
    %v1117 = vsel %vm715, %v389, %v1116
    %v1118 = vsel %vm703, %v403, %v396
    %v1119 = vsel %vm705, %v410, %v1118
    %v1120 = vsel %vm707, %v417, %v1119
    %v1121 = vsel %vm709, %v424, %v1120
    %v1122 = vsel %vm711, %v431, %v1121
    %v1123 = vsel %vm713, %v438, %v1122
    %v1124 = vsel %vm715, %v445, %v1123
    %v1125 = vsel %vm703, %v459, %v452
    %v1126 = vsel %vm705, %v466, %v1125
    %v1127 = vsel %vm707, %v473, %v1126
    %v1128 = vsel %vm709, %v480, %v1127
    %v1129 = vsel %vm711, %v487, %v1128
    %v1130 = vsel %vm713, %v494, %v1129
    %v1131 = vsel %vm715, %v501, %v1130
    %v1132 = vsel %vm703, %v515, %v508
    %v1133 = vsel %vm705, %v522, %v1132
    %v1134 = vsel %vm707, %v529, %v1133
    %v1135 = vsel %vm709, %v536, %v1134
    %v1136 = vsel %vm711, %v543, %v1135
    %v1137 = vsel %vm713, %v550, %v1136
    %v1138 = vsel %vm715, %v557, %v1137
    %1143 = vst [vmem:[#allocation2] sm:$0xff] %v1117
    %1144 = vst [vmem:[#allocation2 + $0x8] sm:$0xff] %v1124
    %1145 = vst [vmem:[#allocation2 + $0x10] sm:$0xff] %v1131
    %1146 = vst [vmem:[#allocation2 + $0x18] sm:$0xff] %v1138
    %1147 = vst [vmem:[#allocation4] sm:$0xff] %v905
    %1148 = vst [vmem:[#allocation4 + $0x10] sm:$0xff] %v909
    %1149 = vst [vmem:[#allocation4 + $0x20] sm:$0xff] %v915
    %1150 = vst [vmem:[#allocation4 + $0x30] sm:$0xff] %v919
    %1151 = vst [vmem:[#allocation4 + $0x8] sm:$0xff] %v1061
    %1152 = vst [vmem:[#allocation4 + $0x18] sm:$0xff] %v1066
    %1153 = vst [vmem:[#allocation4 + $0x28] sm:$0xff] %v1071
    %1154 = vst [vmem:[#allocation4 + $0x38] sm:$0xff] %v1076
    %1155 = vst [vmem:[#allocation6] sm:$0xff] %v907
    %1156 = vst [vmem:[#allocation6 + $0x8] sm:$0xff] %v958
    %1157 = vst [vmem:[#allocation6 + $0x18] sm:$0xff] %v911
    %1158 = vst [vmem:[#allocation6 + $0x20] sm:$0xff] %v961
    %1159 = vst [vmem:[#allocation6 + $0x30] sm:$0xff] %v917
    %1160 = vst [vmem:[#allocation6 + $0x38] sm:$0xff] %v966
    %1161 = vst [vmem:[#allocation6 + $0x48] sm:$0xff] %v921
    %1162 = vst [vmem:[#allocation6 + $0x50] sm:$0xff] %v969
    %1163 = vst [vmem:[#allocation6 + $0x10] sm:$0xff] %v1061
    %1164 = vst [vmem:[#allocation6 + $0x28] sm:$0xff] %v1066
    %1165 = vst [vmem:[#allocation6 + $0x40] sm:$0xff] %v1071
    %1166 = vst [vmem:[#allocation6 + $0x58] sm:$0xff] %v1076
    // Predicated region
    $region30: #{tpu_custom_call.1} parent=1 // pred_check
      _
    $region31: #{tpu_custom_call.1} parent=1 // pred_check_branch
      %1168 = sbr.rel (0) target = $region33
    $region32: #{tpu_custom_call.1} parent=1 // pred_region
      %s1170 = ssub.s32 512, 512
      %1171 = vsyncadd [#allocation3], %s1170
      %s1172 = sshll.u32 [#allocation2], 4
      %s1173 = int_to_ptr.vmem [resolvable:$true] %s1172
      %1178 = dma.vmem_to_hbm [thread:$0]  %s1173, 512, %s7, [#allocation3], 128, 128, 8
    $region33: #{tpu_custom_call.1} parent=1 // pred_fallthru
      _
    // Predicated region
    $region34: #{tpu_custom_call.1} parent=1 // pred_check
      _
    $region35: #{tpu_custom_call.1} parent=1 // pred_check_branch
      %1180 = sbr.rel (0) target = $region37
    $region36: #{tpu_custom_call.1} parent=1 // pred_region
      %s1182 = ssub.s32 1024, 1024
      %1183 = vsyncadd [#allocation5], %s1182
      %s1184 = sshll.u32 [#allocation4], 4
      %s1185 = int_to_ptr.vmem [resolvable:$true] %s1184
      %1190 = dma.vmem_to_hbm [thread:$0]  %s1185, 1024, %s8, [#allocation5], 256, 256, 16
    $region37: #{tpu_custom_call.1} parent=1 // pred_fallthru
      _
    // Predicated region
    $region38: #{tpu_custom_call.1} parent=1 // pred_check
      _
    $region39: #{tpu_custom_call.1} parent=1 // pred_check_branch
      %1192 = sbr.rel (0) target = $region41
    $region40: #{tpu_custom_call.1} parent=1 // pred_region
      %s1194 = ssub.s32 1536, 1536
      %1195 = vsyncadd [#allocation5], %s1194
      %s1196 = sshll.u32 [#allocation6], 4
      %s1197 = int_to_ptr.vmem [resolvable:$true] %s1196
      %1202 = dma.vmem_to_hbm [thread:$0]  %s1197, 1536, %s9, [#allocation5], 384, 384, 24
    $region41: #{tpu_custom_call.1} parent=1 // pred_fallthru
      _
    // Predicated region
    $region42: #{tpu_custom_call.1} parent=1 // pred_check
      _
    $region43: #{tpu_custom_call.1} parent=1 // pred_check_branch
      %1204 = sbr.rel (0) target = $region45
    $region44: #{tpu_custom_call.1} parent=1 // pred_region
      %1205 = dma.done [#allocation3], 512
    $region45: #{tpu_custom_call.1} parent=1 // pred_fallthru
      _
    // Predicated region
    $region46: #{tpu_custom_call.1} parent=1 // pred_check
      _
    $region47: #{tpu_custom_call.1} parent=1 // pred_check_branch
      %1207 = sbr.rel (0) target = $region49
    $region48: #{tpu_custom_call.1} parent=1 // pred_region
      %1208 = dma.done [#allocation5], 1024
    $region49: #{tpu_custom_call.1} parent=1 // pred_fallthru
      _
    // Predicated region
    $region50: #{tpu_custom_call.1} parent=1 // pred_check
      _
    $region51: #{tpu_custom_call.1} parent=1 // pred_check_branch
      %1210 = sbr.rel (0) target = $region53
    $region52: #{tpu_custom_call.1} parent=1 // pred_region
      %1211 = dma.done [#allocation5], 1536
    $region53: #{tpu_custom_call.1} parent=1 // pred_fallthru
      _
    %1212 = vsyncpa [#allocation3], 1
    %1213 = vsyncpa [#allocation5], 1

</llo_original>
